<compile_context>
chip_gen: v5e
topology: v5e:2x2
jax: 0.10.0
libtpu: 0.0.40
codegen_flags: <defaults>
</compile_context>

<pallas_src>
import math
import functools

import jax
import jax.numpy as jnp
from jax.experimental import pallas as pl
from jax.experimental.pallas import tpu as pltpu  # noqa: F401

# ----------------------- model hyper-parameters (small) -----------------------
B = 2         # batch
S = 8         # sequence length
D = 32        # d_model
H = 4         # number of attention heads
DFF = 64      # feed-forward hidden dim
EPS = 1e-6


# --------------------------------- kernel ------------------------------------
def _encoder_layer_kernel(
    x_ref,        # (B, S, D)      full activation
    vecs_ref,     # (8, VEC_W)     packed LN scales/biases + all bias vectors
    wqkv_ref,     # (D, 3D)        fused Q|K|V projection
    wo_ref,       # (D, D)
    w1_ref,       # (D, DFF)
    w2_ref,       # (DFF, D)
    o_ref,        # (B, S, D)
    *,
    n_heads: int,
):
    b, s, d = x_ref.shape
    dff = w1_ref.shape[1]
    d_k = d // n_heads
    bs = b * s

    x3 = x_ref[...].astype(jnp.float32)          # (B, S, D)
    x2 = x3.reshape(bs, d)                       # (B*S, D) — leading-dim merge only

    # Unpack the lane-dense parameter-vector slab (each row starts at lane 0).
    vecs = vecs_ref[...]
    ln0_a = vecs[0:1, :d]
    ln0_b = vecs[1:2, :d]
    ln1_a = vecs[2:3, :d]
    ln1_b = vecs[3:4, :d]
    bqkv  = vecs[4:5, :3 * d]
    bo    = vecs[5:6, :d]
    b1    = vecs[6:7, :dff]
    b2    = vecs[7:8, :d]

    def layer_norm(v, a, bb):
        mean = jnp.mean(v, axis=-1, keepdims=True)
        # torch.std -> unbiased (ddof=1); eps added to std, not variance.
        var = jnp.sum((v - mean) ** 2, axis=-1, keepdims=True) / (d - 1)
        std = jnp.sqrt(var)
        return a * (v - mean) / (std + EPS) + bb

    # ---------------- sublayer 0: multi-head self-attention ----------------
    xn = layer_norm(x2, ln0_a, ln0_b)
    qkv = jnp.dot(xn, wqkv_ref[...], preferred_element_type=jnp.float32) + bqkv
    qkv3 = qkv.reshape(b, s, 3 * d)              # (B, S, 3D)

    wo = wo_ref[...]
    inv_sqrt_dk = 1.0 / math.sqrt(d_k)
    attn2 = jnp.zeros((bs, d), jnp.float32)
    for h in range(n_heads):                     # static unroll (H=4)
        lo = h * d_k
        qh = qkv3[:, :, lo:lo + d_k]                     # (B, S, d_k)
        kh = qkv3[:, :, d + lo:d + lo + d_k]             # (B, S, d_k)
        vh = qkv3[:, :, 2 * d + lo:2 * d + lo + d_k]     # (B, S, d_k)
        # Batched over B; contraction handles the transpose (no kh.T / XLU).
        sc = jnp.einsum("bqd,bkd->bqk", qh, kh,
                        preferred_element_type=jnp.float32) * inv_sqrt_dk
        sc = sc - jnp.max(sc, axis=-1, keepdims=True)
        e = jnp.exp(sc)
        # exact reciprocal (approx=True would loosen the 1e-4 tolerance)
        p = e * pl.reciprocal(jnp.sum(e, axis=-1, keepdims=True), approx=False)
        hv = jnp.einsum("bqk,bkd->bqd", p, vh,
                        preferred_element_type=jnp.float32)   # (B, S, d_k)
        # Fold this head through its W_O slice -> no lane-concat of heads.
        attn2 = attn2 + jnp.dot(hv.reshape(bs, d_k), wo[lo:lo + d_k, :],
                                preferred_element_type=jnp.float32)
    x1 = x2 + attn2 + bo                          # residual (+ output bias)

    # ---------------- sublayer 1: position-wise feed-forward ----------------
    xn2 = layer_norm(x1, ln1_a, ln1_b)
    h1 = jnp.maximum(
        jnp.dot(xn2, w1_ref[...], preferred_element_type=jnp.float32) + b1, 0.0)
    ff = jnp.dot(h1, w2_ref[...], preferred_element_type=jnp.float32) + b2
    o_ref[...] = (x1 + ff).reshape(b, s, d).astype(o_ref.dtype)


# -------------------------------- wrapper ------------------------------------
def encoder_layer(x, params, n_heads=H):
    """x: (B, S, D) float32."""
    b, s, d = x.shape
    dff = params["w1"].shape[1]

    # Fuse Q/K/V projection weights & biases wrapper-side.
    wqkv = jnp.concatenate([params["wq"], params["wk"], params["wv"]], axis=1)
    bqkv = jnp.concatenate([params["bq"], params["bk"], params["bv"]], axis=1)

    # Pack all small vectors into one lane-dense (8, vec_w) slab (one VMEM tile).
    vec_w = max(128, ((max(3 * d, dff, d) + 127) // 128) * 128)

    def row(v):
        v = jnp.asarray(v, jnp.float32).reshape(1, -1)
        return jnp.pad(v, ((0, 0), (0, vec_w - v.shape[1])))

    vecs = jnp.concatenate(
        [row(params["ln0_a"]), row(params["ln0_b"]),
         row(params["ln1_a"]), row(params["ln1_b"]),
         row(bqkv), row(params["bo"]),
         row(params["b1"]), row(params["b2"])],
        axis=0,
    )  # (8, vec_w)

    kernel = functools.partial(_encoder_layer_kernel, n_heads=n_heads)

    # Single kernel invocation: no grid, every operand is a full-array VMEM block.
    return pl.pallas_call(
        kernel,
        out_shape=jax.ShapeDtypeStruct((b, s, d), x.dtype),
    )(x, vecs, wqkv, params["wo"], params["w1"], params["w2"])


# --------------------------- pure-JAX reference -------------------------------
def reference_encoder_layer(x, params, n_heads=H):
    d = x.shape[-1]
    d_k = d // n_heads

    def ln(v, a, b):
        mean = jnp.mean(v, axis=-1, keepdims=True)
        var = jnp.sum((v - mean) ** 2, axis=-1, keepdims=True) / (d - 1)
        std = jnp.sqrt(var)
        return a * (v - mean) / (std + EPS) + b

    xn = ln(x, params["ln0_a"], params["ln0_b"])
    q = xn @ params["wq"] + params["bq"]
    k = xn @ params["wk"] + params["bk"]
    v = xn @ params["wv"] + params["bv"]

    def split(t):  # (B,S,D) -> (B,H,S,d_k)
        bsz, seq, _ = t.shape
        return t.reshape(bsz, seq, n_heads, d_k).transpose(0, 2, 1, 3)

    qh, kh, vh = split(q), split(k), split(v)
    scores = jnp.einsum("bhqd,bhkd->bhqk", qh, kh) / math.sqrt(d_k)
    p = jax.nn.softmax(scores, axis=-1)
    attn = jnp.einsum("bhqk,bhkd->bhqd", p, vh)
    attn = attn.transpose(0, 2, 1, 3).reshape(x.shape)
    attn = attn @ params["wo"] + params["bo"]
    x1 = x + attn

    xn2 = ln(x1, params["ln1_a"], params["ln1_b"])
    ff = jnp.maximum(xn2 @ params["w1"] + params["b1"], 0.0) @ params["w2"] + params["b2"]
    return x1 + ff


# ----------------------------------- main -------------------------------------
if __name__ == "__main__":
    key = jax.random.PRNGKey(0)
    keys = jax.random.split(key, 13)

    scale = 0.1
    params = {
        "ln0_a": jnp.ones((1, D), jnp.float32),
        "ln0_b": jnp.zeros((1, D), jnp.float32),
        "ln1_a": jnp.ones((1, D), jnp.float32),
        "ln1_b": jnp.zeros((1, D), jnp.float32),
        "wq": scale * jax.random.normal(keys[0], (D, D), jnp.float32),
        "bq": scale * jax.random.normal(keys[1], (1, D), jnp.float32),
        "wk": scale * jax.random.normal(keys[2], (D, D), jnp.float32),
        "bk": scale * jax.random.normal(keys[3], (1, D), jnp.float32),
        "wv": scale * jax.random.normal(keys[4], (D, D), jnp.float32),
        "bv": scale * jax.random.normal(keys[5], (1, D), jnp.float32),
        "wo": scale * jax.random.normal(keys[6], (D, D), jnp.float32),
        "bo": scale * jax.random.normal(keys[7], (1, D), jnp.float32),
        "w1": scale * jax.random.normal(keys[8], (D, DFF), jnp.float32),
        "b1": scale * jax.random.normal(keys[9], (1, DFF), jnp.float32),
        "w2": scale * jax.random.normal(keys[10], (DFF, D), jnp.float32),
        "b2": scale * jax.random.normal(keys[11], (1, D), jnp.float32),
    }

    x = jax.random.normal(keys[12], (B, S, D), jnp.float32)

    out = jax.block_until_ready(encoder_layer(x, params))
    ref = jax.block_until_ready(reference_encoder_layer(x, params))

    assert out.shape == (B, S, D), out.shape
    assert jnp.allclose(out, ref, atol=1e-4, rtol=1e-4), (
        float(jnp.max(jnp.abs(out - ref)))
    )
    print("KERNEL_OK")
</pallas_src>

<mosaic_0001>
module attributes {stable_mosaic.version = 11 : i64} {
  func.func @_encoder_layer_kernel(%arg0: memref<2x8x32xf32, #tpu.memory_space<vmem>>, %arg1: memref<8x128xf32, #tpu.memory_space<vmem>>, %arg2: memref<32x96xf32, #tpu.memory_space<vmem>>, %arg3: memref<32x32xf32, #tpu.memory_space<vmem>>, %arg4: memref<32x64xf32, #tpu.memory_space<vmem>>, %arg5: memref<64x32xf32, #tpu.memory_space<vmem>>, %arg6: memref<2x8x32xf32, #tpu.memory_space<vmem>>) attributes {dimension_semantics = [], scalar_prefetch = 0 : i64, scratch_operands = 0 : i64, tpu.core_type = #tpu.core_type<tc>} {
    %c0 = arith.constant 0 : index
    %c0_0 = arith.constant 0 : index
    %c0_1 = arith.constant 0 : index
    %0 = vector.load %arg0[%c0, %c0_0, %c0_1] : memref<2x8x32xf32, #tpu.memory_space<vmem>>, vector<2x8x32xf32>
    %1 = vector.shape_cast %0 : vector<2x8x32xf32> to vector<16x32xf32>
    %c0_2 = arith.constant 0 : index
    %c0_3 = arith.constant 0 : index
    %2 = vector.load %arg1[%c0_2, %c0_3] : memref<8x128xf32, #tpu.memory_space<vmem>>, vector<8x128xf32>
    %3 = vector.extract_strided_slice %2 {offsets = [0, 0], sizes = [1, 32], strides = [1, 1]} : vector<8x128xf32> to vector<1x32xf32>
    %4 = vector.extract_strided_slice %2 {offsets = [1, 0], sizes = [1, 32], strides = [1, 1]} : vector<8x128xf32> to vector<1x32xf32>
    %5 = vector.extract_strided_slice %2 {offsets = [2, 0], sizes = [1, 32], strides = [1, 1]} : vector<8x128xf32> to vector<1x32xf32>
    %6 = vector.extract_strided_slice %2 {offsets = [3, 0], sizes = [1, 32], strides = [1, 1]} : vector<8x128xf32> to vector<1x32xf32>
    %7 = vector.extract_strided_slice %2 {offsets = [4, 0], sizes = [1, 96], strides = [1, 1]} : vector<8x128xf32> to vector<1x96xf32>
    %8 = vector.extract_strided_slice %2 {offsets = [5, 0], sizes = [1, 32], strides = [1, 1]} : vector<8x128xf32> to vector<1x32xf32>
    %9 = vector.extract_strided_slice %2 {offsets = [6, 0], sizes = [1, 64], strides = [1, 1]} : vector<8x128xf32> to vector<1x64xf32>
    %10 = vector.extract_strided_slice %2 {offsets = [7, 0], sizes = [1, 32], strides = [1, 1]} : vector<8x128xf32> to vector<1x32xf32>
    %cst = arith.constant dense<0.000000e+00> : vector<16xf32>
    %11 = vector.multi_reduction <add>, %1, %cst [1] : vector<16x32xf32> to vector<16xf32>
    %12 = vector.shape_cast %11 : vector<16xf32> to vector<16x1xf32>
    %cst_4 = arith.constant 3.200000e+01 : f32
    %13 = vector.broadcast %cst_4 : f32 to vector<16x1xf32>
    %14 = arith.divf %12, %13 : vector<16x1xf32>
    %15 = vector.broadcast %14 : vector<16x1xf32> to vector<16x32xf32>
    %16 = arith.subf %1, %15 : vector<16x32xf32>
    %17 = arith.mulf %16, %16 : vector<16x32xf32>
    %cst_5 = arith.constant dense<0.000000e+00> : vector<16xf32>
    %18 = vector.multi_reduction <add>, %17, %cst_5 [1] : vector<16x32xf32> to vector<16xf32>
    %19 = vector.shape_cast %18 : vector<16xf32> to vector<16x1xf32>
    %cst_6 = arith.constant 3.100000e+01 : f32
    %20 = vector.broadcast %cst_6 : f32 to vector<16x1xf32>
    %21 = arith.divf %19, %20 : vector<16x1xf32>
    %22 = math.sqrt %21 : vector<16x1xf32>
    %23 = vector.broadcast %14 : vector<16x1xf32> to vector<16x32xf32>
    %24 = arith.subf %1, %23 : vector<16x32xf32>
    %25 = vector.broadcast %3 : vector<1x32xf32> to vector<16x32xf32>
    %26 = arith.mulf %25, %24 : vector<16x32xf32>
    %cst_7 = arith.constant 9.99999997E-7 : f32
    %27 = vector.broadcast %cst_7 : f32 to vector<16x1xf32>
    %28 = arith.addf %22, %27 : vector<16x1xf32>
    %29 = vector.broadcast %28 : vector<16x1xf32> to vector<16x32xf32>
    %30 = arith.divf %26, %29 : vector<16x32xf32>
    %31 = vector.broadcast %4 : vector<1x32xf32> to vector<16x32xf32>
    %32 = arith.addf %30, %31 : vector<16x32xf32>
    %c0_8 = arith.constant 0 : index
    %c0_9 = arith.constant 0 : index
    %33 = vector.load %arg2[%c0_8, %c0_9] : memref<32x96xf32, #tpu.memory_space<vmem>>, vector<32x96xf32>
    %cst_10 = arith.constant dense<0.000000e+00> : vector<16x96xf32>
    %34 = tpu.matmul %32, %33, %cst_10 {dimension_numbers = #tpu.dot_dimension_numbers<[1], [0], [0], [1], [0, 0, 1, 1], [], []>} : vector<16x32xf32>, vector<32x96xf32>, vector<16x96xf32> -> vector<16x96xf32>
    %35 = vector.broadcast %7 : vector<1x96xf32> to vector<16x96xf32>
    %36 = arith.addf %34, %35 : vector<16x96xf32>
    %37 = vector.shape_cast %36 : vector<16x96xf32> to vector<2x8x96xf32>
    %c0_11 = arith.constant 0 : index
    %c0_12 = arith.constant 0 : index
    %38 = vector.load %arg3[%c0_11, %c0_12] : memref<32x32xf32, #tpu.memory_space<vmem>>, vector<32x32xf32>
    %cst_13 = arith.constant 0.000000e+00 : f32
    %39 = vector.broadcast %cst_13 : f32 to vector<16x32xf32>
    %40 = vector.extract_strided_slice %37 {offsets = [0, 0, 0], sizes = [2, 8, 8], strides = [1, 1, 1]} : vector<2x8x96xf32> to vector<2x8x8xf32>
    %41 = vector.extract_strided_slice %37 {offsets = [0, 0, 32], sizes = [2, 8, 8], strides = [1, 1, 1]} : vector<2x8x96xf32> to vector<2x8x8xf32>
    %42 = vector.extract_strided_slice %37 {offsets = [0, 0, 64], sizes = [2, 8, 8], strides = [1, 1, 1]} : vector<2x8x96xf32> to vector<2x8x8xf32>
    "tpu.trace_start"() <{level = 10 : i32, message = "bqd,bkd->bqk"}> : () -> ()
    %cst_14 = arith.constant dense<0.000000e+00> : vector<2x8x8xf32>
    %43 = tpu.matmul %40, %41, %cst_14 {dimension_numbers = #tpu.dot_dimension_numbers<[2], [2], [1], [1], [0, 0, 0, 1, 1, 1], [0], [0]>} : vector<2x8x8xf32>, vector<2x8x8xf32>, vector<2x8x8xf32> -> vector<2x8x8xf32>
    "tpu.trace_stop"() : () -> ()
    %cst_15 = arith.constant 0.353553385 : f32
    %44 = vector.broadcast %cst_15 : f32 to vector<2x8x8xf32>
    %45 = arith.mulf %43, %44 : vector<2x8x8xf32>
    %cst_16 = arith.constant dense<0xFF800000> : vector<2x8xf32>
    %46 = vector.multi_reduction <maximumf>, %45, %cst_16 [2] : vector<2x8x8xf32> to vector<2x8xf32>
    %47 = vector.shape_cast %46 : vector<2x8xf32> to vector<2x8x1xf32>
    %48 = vector.broadcast %47 : vector<2x8x1xf32> to vector<2x8x8xf32>
    %49 = arith.subf %45, %48 : vector<2x8x8xf32>
    %50 = math.exp %49 : vector<2x8x8xf32>
    %cst_17 = arith.constant dense<0.000000e+00> : vector<2x8xf32>
    %51 = vector.multi_reduction <add>, %50, %cst_17 [2] : vector<2x8x8xf32> to vector<2x8xf32>
    %52 = vector.shape_cast %51 : vector<2x8xf32> to vector<2x8x1xf32>
    %53 = tpu.reciprocal %52 : vector<2x8x1xf32> -> vector<2x8x1xf32>
    %54 = vector.broadcast %53 : vector<2x8x1xf32> to vector<2x8x8xf32>
    %55 = arith.mulf %50, %54 : vector<2x8x8xf32>
    "tpu.trace_start"() <{level = 10 : i32, message = "bqk,bkd->bqd"}> : () -> ()
    %cst_18 = arith.constant dense<0.000000e+00> : vector<2x8x8xf32>
    %56 = tpu.matmul %55, %42, %cst_18 {dimension_numbers = #tpu.dot_dimension_numbers<[2], [1], [1], [2], [0, 0, 0, 1, 1, 2], [0], [0]>} : vector<2x8x8xf32>, vector<2x8x8xf32>, vector<2x8x8xf32> -> vector<2x8x8xf32>
    "tpu.trace_stop"() : () -> ()
    %57 = vector.shape_cast %56 : vector<2x8x8xf32> to vector<16x8xf32>
    %58 = vector.extract_strided_slice %38 {offsets = [0, 0], sizes = [8, 32], strides = [1, 1]} : vector<32x32xf32> to vector<8x32xf32>
    %cst_19 = arith.constant dense<0.000000e+00> : vector<16x32xf32>
    %59 = tpu.matmul %57, %58, %cst_19 {dimension_numbers = #tpu.dot_dimension_numbers<[1], [0], [0], [1], [0, 0, 1, 1], [], []>} : vector<16x8xf32>, vector<8x32xf32>, vector<16x32xf32> -> vector<16x32xf32>
    %60 = arith.addf %39, %59 : vector<16x32xf32>
    %61 = vector.extract_strided_slice %37 {offsets = [0, 0, 8], sizes = [2, 8, 8], strides = [1, 1, 1]} : vector<2x8x96xf32> to vector<2x8x8xf32>
    %62 = vector.extract_strided_slice %37 {offsets = [0, 0, 40], sizes = [2, 8, 8], strides = [1, 1, 1]} : vector<2x8x96xf32> to vector<2x8x8xf32>
    %63 = vector.extract_strided_slice %37 {offsets = [0, 0, 72], sizes = [2, 8, 8], strides = [1, 1, 1]} : vector<2x8x96xf32> to vector<2x8x8xf32>
    "tpu.trace_start"() <{level = 10 : i32, message = "bqd,bkd->bqk"}> : () -> ()
    %cst_20 = arith.constant dense<0.000000e+00> : vector<2x8x8xf32>
    %64 = tpu.matmul %61, %62, %cst_20 {dimension_numbers = #tpu.dot_dimension_numbers<[2], [2], [1], [1], [0, 0, 0, 1, 1, 1], [0], [0]>} : vector<2x8x8xf32>, vector<2x8x8xf32>, vector<2x8x8xf32> -> vector<2x8x8xf32>
    "tpu.trace_stop"() : () -> ()
    %cst_21 = arith.constant 0.353553385 : f32
    %65 = vector.broadcast %cst_21 : f32 to vector<2x8x8xf32>
    %66 = arith.mulf %64, %65 : vector<2x8x8xf32>
    %cst_22 = arith.constant dense<0xFF800000> : vector<2x8xf32>
    %67 = vector.multi_reduction <maximumf>, %66, %cst_22 [2] : vector<2x8x8xf32> to vector<2x8xf32>
    %68 = vector.shape_cast %67 : vector<2x8xf32> to vector<2x8x1xf32>
    %69 = vector.broadcast %68 : vector<2x8x1xf32> to vector<2x8x8xf32>
    %70 = arith.subf %66, %69 : vector<2x8x8xf32>
    %71 = math.exp %70 : vector<2x8x8xf32>
    %cst_23 = arith.constant dense<0.000000e+00> : vector<2x8xf32>
    %72 = vector.multi_reduction <add>, %71, %cst_23 [2] : vector<2x8x8xf32> to vector<2x8xf32>
    %73 = vector.shape_cast %72 : vector<2x8xf32> to vector<2x8x1xf32>
    %74 = tpu.reciprocal %73 : vector<2x8x1xf32> -> vector<2x8x1xf32>
    %75 = vector.broadcast %74 : vector<2x8x1xf32> to vector<2x8x8xf32>
    %76 = arith.mulf %71, %75 : vector<2x8x8xf32>
    "tpu.trace_start"() <{level = 10 : i32, message = "bqk,bkd->bqd"}> : () -> ()
    %cst_24 = arith.constant dense<0.000000e+00> : vector<2x8x8xf32>
    %77 = tpu.matmul %76, %63, %cst_24 {dimension_numbers = #tpu.dot_dimension_numbers<[2], [1], [1], [2], [0, 0, 0, 1, 1, 2], [0], [0]>} : vector<2x8x8xf32>, vector<2x8x8xf32>, vector<2x8x8xf32> -> vector<2x8x8xf32>
    "tpu.trace_stop"() : () -> ()
    %78 = vector.shape_cast %77 : vector<2x8x8xf32> to vector<16x8xf32>
    %79 = vector.extract_strided_slice %38 {offsets = [8, 0], sizes = [8, 32], strides = [1, 1]} : vector<32x32xf32> to vector<8x32xf32>
    %cst_25 = arith.constant dense<0.000000e+00> : vector<16x32xf32>
    %80 = tpu.matmul %78, %79, %cst_25 {dimension_numbers = #tpu.dot_dimension_numbers<[1], [0], [0], [1], [0, 0, 1, 1], [], []>} : vector<16x8xf32>, vector<8x32xf32>, vector<16x32xf32> -> vector<16x32xf32>
    %81 = arith.addf %60, %80 : vector<16x32xf32>
    %82 = vector.extract_strided_slice %37 {offsets = [0, 0, 16], sizes = [2, 8, 8], strides = [1, 1, 1]} : vector<2x8x96xf32> to vector<2x8x8xf32>
    %83 = vector.extract_strided_slice %37 {offsets = [0, 0, 48], sizes = [2, 8, 8], strides = [1, 1, 1]} : vector<2x8x96xf32> to vector<2x8x8xf32>
    %84 = vector.extract_strided_slice %37 {offsets = [0, 0, 80], sizes = [2, 8, 8], strides = [1, 1, 1]} : vector<2x8x96xf32> to vector<2x8x8xf32>
    "tpu.trace_start"() <{level = 10 : i32, message = "bqd,bkd->bqk"}> : () -> ()
    %cst_26 = arith.constant dense<0.000000e+00> : vector<2x8x8xf32>
    %85 = tpu.matmul %82, %83, %cst_26 {dimension_numbers = #tpu.dot_dimension_numbers<[2], [2], [1], [1], [0, 0, 0, 1, 1, 1], [0], [0]>} : vector<2x8x8xf32>, vector<2x8x8xf32>, vector<2x8x8xf32> -> vector<2x8x8xf32>
    "tpu.trace_stop"() : () -> ()
    %cst_27 = arith.constant 0.353553385 : f32
    %86 = vector.broadcast %cst_27 : f32 to vector<2x8x8xf32>
    %87 = arith.mulf %85, %86 : vector<2x8x8xf32>
    %cst_28 = arith.constant dense<0xFF800000> : vector<2x8xf32>
    %88 = vector.multi_reduction <maximumf>, %87, %cst_28 [2] : vector<2x8x8xf32> to vector<2x8xf32>
    %89 = vector.shape_cast %88 : vector<2x8xf32> to vector<2x8x1xf32>
    %90 = vector.broadcast %89 : vector<2x8x1xf32> to vector<2x8x8xf32>
    %91 = arith.subf %87, %90 : vector<2x8x8xf32>
    %92 = math.exp %91 : vector<2x8x8xf32>
    %cst_29 = arith.constant dense<0.000000e+00> : vector<2x8xf32>
    %93 = vector.multi_reduction <add>, %92, %cst_29 [2] : vector<2x8x8xf32> to vector<2x8xf32>
    %94 = vector.shape_cast %93 : vector<2x8xf32> to vector<2x8x1xf32>
    %95 = tpu.reciprocal %94 : vector<2x8x1xf32> -> vector<2x8x1xf32>
    %96 = vector.broadcast %95 : vector<2x8x1xf32> to vector<2x8x8xf32>
    %97 = arith.mulf %92, %96 : vector<2x8x8xf32>
    "tpu.trace_start"() <{level = 10 : i32, message = "bqk,bkd->bqd"}> : () -> ()
    %cst_30 = arith.constant dense<0.000000e+00> : vector<2x8x8xf32>
    %98 = tpu.matmul %97, %84, %cst_30 {dimension_numbers = #tpu.dot_dimension_numbers<[2], [1], [1], [2], [0, 0, 0, 1, 1, 2], [0], [0]>} : vector<2x8x8xf32>, vector<2x8x8xf32>, vector<2x8x8xf32> -> vector<2x8x8xf32>
    "tpu.trace_stop"() : () -> ()
    %99 = vector.shape_cast %98 : vector<2x8x8xf32> to vector<16x8xf32>
    %100 = vector.extract_strided_slice %38 {offsets = [16, 0], sizes = [8, 32], strides = [1, 1]} : vector<32x32xf32> to vector<8x32xf32>
    %cst_31 = arith.constant dense<0.000000e+00> : vector<16x32xf32>
    %101 = tpu.matmul %99, %100, %cst_31 {dimension_numbers = #tpu.dot_dimension_numbers<[1], [0], [0], [1], [0, 0, 1, 1], [], []>} : vector<16x8xf32>, vector<8x32xf32>, vector<16x32xf32> -> vector<16x32xf32>
    %102 = arith.addf %81, %101 : vector<16x32xf32>
    %103 = vector.extract_strided_slice %37 {offsets = [0, 0, 24], sizes = [2, 8, 8], strides = [1, 1, 1]} : vector<2x8x96xf32> to vector<2x8x8xf32>
    %104 = vector.extract_strided_slice %37 {offsets = [0, 0, 56], sizes = [2, 8, 8], strides = [1, 1, 1]} : vector<2x8x96xf32> to vector<2x8x8xf32>
    %105 = vector.extract_strided_slice %37 {offsets = [0, 0, 88], sizes = [2, 8, 8], strides = [1, 1, 1]} : vector<2x8x96xf32> to vector<2x8x8xf32>
    "tpu.trace_start"() <{level = 10 : i32, message = "bqd,bkd->bqk"}> : () -> ()
    %cst_32 = arith.constant dense<0.000000e+00> : vector<2x8x8xf32>
    %106 = tpu.matmul %103, %104, %cst_32 {dimension_numbers = #tpu.dot_dimension_numbers<[2], [2], [1], [1], [0, 0, 0, 1, 1, 1], [0], [0]>} : vector<2x8x8xf32>, vector<2x8x8xf32>, vector<2x8x8xf32> -> vector<2x8x8xf32>
    "tpu.trace_stop"() : () -> ()
    %cst_33 = arith.constant 0.353553385 : f32
    %107 = vector.broadcast %cst_33 : f32 to vector<2x8x8xf32>
    %108 = arith.mulf %106, %107 : vector<2x8x8xf32>
    %cst_34 = arith.constant dense<0xFF800000> : vector<2x8xf32>
    %109 = vector.multi_reduction <maximumf>, %108, %cst_34 [2] : vector<2x8x8xf32> to vector<2x8xf32>
    %110 = vector.shape_cast %109 : vector<2x8xf32> to vector<2x8x1xf32>
    %111 = vector.broadcast %110 : vector<2x8x1xf32> to vector<2x8x8xf32>
    %112 = arith.subf %108, %111 : vector<2x8x8xf32>
    %113 = math.exp %112 : vector<2x8x8xf32>
    %cst_35 = arith.constant dense<0.000000e+00> : vector<2x8xf32>
    %114 = vector.multi_reduction <add>, %113, %cst_35 [2] : vector<2x8x8xf32> to vector<2x8xf32>
    %115 = vector.shape_cast %114 : vector<2x8xf32> to vector<2x8x1xf32>
    %116 = tpu.reciprocal %115 : vector<2x8x1xf32> -> vector<2x8x1xf32>
    %117 = vector.broadcast %116 : vector<2x8x1xf32> to vector<2x8x8xf32>
    %118 = arith.mulf %113, %117 : vector<2x8x8xf32>
    "tpu.trace_start"() <{level = 10 : i32, message = "bqk,bkd->bqd"}> : () -> ()
    %cst_36 = arith.constant dense<0.000000e+00> : vector<2x8x8xf32>
    %119 = tpu.matmul %118, %105, %cst_36 {dimension_numbers = #tpu.dot_dimension_numbers<[2], [1], [1], [2], [0, 0, 0, 1, 1, 2], [0], [0]>} : vector<2x8x8xf32>, vector<2x8x8xf32>, vector<2x8x8xf32> -> vector<2x8x8xf32>
    "tpu.trace_stop"() : () -> ()
    %120 = vector.shape_cast %119 : vector<2x8x8xf32> to vector<16x8xf32>
    %121 = vector.extract_strided_slice %38 {offsets = [24, 0], sizes = [8, 32], strides = [1, 1]} : vector<32x32xf32> to vector<8x32xf32>
    %cst_37 = arith.constant dense<0.000000e+00> : vector<16x32xf32>
    %122 = tpu.matmul %120, %121, %cst_37 {dimension_numbers = #tpu.dot_dimension_numbers<[1], [0], [0], [1], [0, 0, 1, 1], [], []>} : vector<16x8xf32>, vector<8x32xf32>, vector<16x32xf32> -> vector<16x32xf32>
    %123 = arith.addf %102, %122 : vector<16x32xf32>
    %124 = arith.addf %1, %123 : vector<16x32xf32>
    %125 = vector.broadcast %8 : vector<1x32xf32> to vector<16x32xf32>
    %126 = arith.addf %124, %125 : vector<16x32xf32>
    %cst_38 = arith.constant dense<0.000000e+00> : vector<16xf32>
    %127 = vector.multi_reduction <add>, %126, %cst_38 [1] : vector<16x32xf32> to vector<16xf32>
    %128 = vector.shape_cast %127 : vector<16xf32> to vector<16x1xf32>
    %cst_39 = arith.constant 3.200000e+01 : f32
    %129 = vector.broadcast %cst_39 : f32 to vector<16x1xf32>
    %130 = arith.divf %128, %129 : vector<16x1xf32>
    %131 = vector.broadcast %130 : vector<16x1xf32> to vector<16x32xf32>
    %132 = arith.subf %126, %131 : vector<16x32xf32>
    %133 = arith.mulf %132, %132 : vector<16x32xf32>
    %cst_40 = arith.constant dense<0.000000e+00> : vector<16xf32>
    %134 = vector.multi_reduction <add>, %133, %cst_40 [1] : vector<16x32xf32> to vector<16xf32>
    %135 = vector.shape_cast %134 : vector<16xf32> to vector<16x1xf32>
    %cst_41 = arith.constant 3.100000e+01 : f32
    %136 = vector.broadcast %cst_41 : f32 to vector<16x1xf32>
    %137 = arith.divf %135, %136 : vector<16x1xf32>
    %138 = math.sqrt %137 : vector<16x1xf32>
    %139 = vector.broadcast %130 : vector<16x1xf32> to vector<16x32xf32>
    %140 = arith.subf %126, %139 : vector<16x32xf32>
    %141 = vector.broadcast %5 : vector<1x32xf32> to vector<16x32xf32>
    %142 = arith.mulf %141, %140 : vector<16x32xf32>
    %cst_42 = arith.constant 9.99999997E-7 : f32
    %143 = vector.broadcast %cst_42 : f32 to vector<16x1xf32>
    %144 = arith.addf %138, %143 : vector<16x1xf32>
    %145 = vector.broadcast %144 : vector<16x1xf32> to vector<16x32xf32>
    %146 = arith.divf %142, %145 : vector<16x32xf32>
    %147 = vector.broadcast %6 : vector<1x32xf32> to vector<16x32xf32>
    %148 = arith.addf %146, %147 : vector<16x32xf32>
    %c0_43 = arith.constant 0 : index
    %c0_44 = arith.constant 0 : index
    %149 = vector.load %arg4[%c0_43, %c0_44] : memref<32x64xf32, #tpu.memory_space<vmem>>, vector<32x64xf32>
    %cst_45 = arith.constant dense<0.000000e+00> : vector<16x64xf32>
    %150 = tpu.matmul %148, %149, %cst_45 {dimension_numbers = #tpu.dot_dimension_numbers<[1], [0], [0], [1], [0, 0, 1, 1], [], []>} : vector<16x32xf32>, vector<32x64xf32>, vector<16x64xf32> -> vector<16x64xf32>
    %151 = vector.broadcast %9 : vector<1x64xf32> to vector<16x64xf32>
    %152 = arith.addf %150, %151 : vector<16x64xf32>
    %cst_46 = arith.constant 0.000000e+00 : f32
    %153 = vector.broadcast %cst_46 : f32 to vector<16x64xf32>
    %154 = arith.maximumf %152, %153 : vector<16x64xf32>
    %c0_47 = arith.constant 0 : index
    %c0_48 = arith.constant 0 : index
    %155 = vector.load %arg5[%c0_47, %c0_48] : memref<64x32xf32, #tpu.memory_space<vmem>>, vector<64x32xf32>
    %cst_49 = arith.constant dense<0.000000e+00> : vector<16x32xf32>
    %156 = tpu.matmul %154, %155, %cst_49 {dimension_numbers = #tpu.dot_dimension_numbers<[1], [0], [0], [1], [0, 0, 1, 1], [], []>} : vector<16x64xf32>, vector<64x32xf32>, vector<16x32xf32> -> vector<16x32xf32>
    %157 = vector.broadcast %10 : vector<1x32xf32> to vector<16x32xf32>
    %158 = arith.addf %156, %157 : vector<16x32xf32>
    %159 = arith.addf %126, %158 : vector<16x32xf32>
    %160 = vector.shape_cast %159 : vector<16x32xf32> to vector<2x8x32xf32>
    %c0_50 = arith.constant 0 : index
    %c0_51 = arith.constant 0 : index
    %c0_52 = arith.constant 0 : index
    %161 = vector.load %arg6[%c0_50, %c0_51, %c0_52] : memref<2x8x32xf32, #tpu.memory_space<vmem>>, vector<2x8x32xf32>
    tpu.vector_store %arg6[%c0_50, %c0_51, %c0_52], %160 {strides = array<i32>} : memref<2x8x32xf32, #tpu.memory_space<vmem>>, vector<2x8x32xf32>,
    return
  }
}

</mosaic_0001>

<llo_original>
// kernel: tpu_custom_call.1
$region0: #{tpu_custom_call.1}
  #allocation0 [shape = 'u32[]', space=smem, size = 0x4, offset = 0x4, fixed_abs, tag = 'smem constant byte address 0x4 - core index']
  #allocation1 [shape = 'u32[72,128]{1,0:T(1,128)}', space=vmem, size = 0x9000, scoped, tag = 'internal scratch']
  %s0 = inlined_call_operand.hbm [shape: f32[2,8,32], index: 0, kind: input, shape index: {}]
  %s1 = inlined_call_operand.hbm [shape: f32[8,128], index: 1, kind: input, shape index: {}]
  %s2 = inlined_call_operand.vmem [shape: f32[32,96], index: 2, kind: input, shape index: {}]
  %s3 = inlined_call_operand.vmem [shape: f32[32,32], index: 3, kind: input, shape index: {}]
  %s4 = inlined_call_operand.vmem [shape: f32[32,64], index: 4, kind: input, shape index: {}]
  %s5 = inlined_call_operand.vmem [shape: f32[64,32], index: 5, kind: input, shape index: {}]
  %s6 = inlined_call_operand.hbm [shape: f32[2,8,32], index: 6, kind: output, shape index: {}]
  %s7 = sld [smem:[#allocation0]]
  $region42: #{tpu_custom_call.1} parent=0
    _
  %s9 = ssub.s32 1, %s7
  %s10 = scalar_select 0, %s9, %s7
  $region1: #{tpu_custom_call.1} parent=0
    #allocation2 [shape = 'u8[8192]{0}', space=vmem, size = 0x2000, scoped, tag = 'input window, operand 0, single buffered']
    #allocation3 [shape = 's32[1]{0}', space=sflag, size = 0x4, scoped, tag = 'scoped memory for tpu_custom_call.1']
    #allocation4 [shape = 's32[1]{0}', space=sflag, size = 0x4, scoped, tag = 'scoped memory for tpu_custom_call.1']
    #allocation5 [shape = 'u8[4096]{0}', space=vmem, size = 0x1000, scoped, tag = 'input window, operand 1, single buffered']
    #allocation6 [shape = 's32[1]{0}', space=sflag, size = 0x4, scoped, tag = 'scoped memory for tpu_custom_call.1']
    #allocation7 [shape = 'u8[8192]{0}', space=vmem, size = 0x2000, scoped, tag = 'output window, operand 0, single buffered']
    %11 = vsyncpa [#allocation3], 0
    %12 = vsyncpa [#allocation6], 0
    %13 = vsyncpa [#allocation4], 0
    // Predicated region
    $region2: #{tpu_custom_call.1} parent=1 // pred_check
      _
    $region3: #{tpu_custom_call.1} parent=1 // pred_check_branch
      %15 = sbr.rel (0) target = $region5
    $region4: #{tpu_custom_call.1} parent=1 // pred_region
      %17 = vsyncadd [#allocation3], 0
      %s18 = sshll.u32 %s0, 4
      %s19 = int_to_ptr.hbm [resolvable:$true] %s18
      %s20 = sshll.u32 [#allocation2], 4
      %s21 = int_to_ptr.vmem [resolvable:$true] %s20
      %26 = dma.hbm_to_vmem [thread:$0]  %s19, 256, %s21, [#allocation3], 128, 128, 8
    $region5: #{tpu_custom_call.1} parent=1 // pred_fallthru
      _
    // Predicated region
    $region6: #{tpu_custom_call.1} parent=1 // pred_check
      _
    $region7: #{tpu_custom_call.1} parent=1 // pred_check_branch
      %28 = sbr.rel (0) target = $region9
    $region8: #{tpu_custom_call.1} parent=1 // pred_region
      %30 = vsyncadd [#allocation6], 0
      %s32 = sshll.u32 %s1, 4
      %s33 = int_to_ptr.hbm [resolvable:$true] %s32
      %s34 = sshll.u32 [#allocation5], 4
      %s35 = int_to_ptr.vmem [resolvable:$true] %s34
      %37 = dma.hbm_to_vmem [thread:$0]  %s33, 128, %s35, [#allocation6]
    $region9: #{tpu_custom_call.1} parent=1 // pred_fallthru
      _
    // Predicated region
    $region10: #{tpu_custom_call.1} parent=1 // pred_check
      _
    $region11: #{tpu_custom_call.1} parent=1 // pred_check_branch
      %39 = sbr.rel (0) target = $region13
    $region12: #{tpu_custom_call.1} parent=1 // pred_region
      _
    $region13: #{tpu_custom_call.1} parent=1 // pred_fallthru
      _
    // Predicated region
    $region14: #{tpu_custom_call.1} parent=1 // pred_check
      _
    $region15: #{tpu_custom_call.1} parent=1 // pred_check_branch
      %41 = sbr.rel (0) target = $region17
    $region16: #{tpu_custom_call.1} parent=1 // pred_region
      _
    $region17: #{tpu_custom_call.1} parent=1 // pred_fallthru
      _
    // Predicated region
    $region18: #{tpu_custom_call.1} parent=1 // pred_check
      _
    $region19: #{tpu_custom_call.1} parent=1 // pred_check_branch
      %43 = sbr.rel (0) target = $region21
    $region20: #{tpu_custom_call.1} parent=1 // pred_region
      _
    $region21: #{tpu_custom_call.1} parent=1 // pred_fallthru
      _
    // Predicated region
    $region22: #{tpu_custom_call.1} parent=1 // pred_check
      _
    $region23: #{tpu_custom_call.1} parent=1 // pred_check_branch
      %45 = sbr.rel (0) target = $region25
    $region24: #{tpu_custom_call.1} parent=1 // pred_region
      _
    $region25: #{tpu_custom_call.1} parent=1 // pred_fallthru
      _
    // Predicated region
    $region26: #{tpu_custom_call.1} parent=1 // pred_check
      _
    $region27: #{tpu_custom_call.1} parent=1 // pred_check_branch
      %47 = sbr.rel (0) target = $region29
    $region28: #{tpu_custom_call.1} parent=1 // pred_region
      %49 = dma.done [#allocation3], 256
    $region29: #{tpu_custom_call.1} parent=1 // pred_fallthru
      _
    // Predicated region
    $region30: #{tpu_custom_call.1} parent=1 // pred_check
      _
    $region31: #{tpu_custom_call.1} parent=1 // pred_check_branch
      %51 = sbr.rel (0) target = $region33
    $region32: #{tpu_custom_call.1} parent=1 // pred_region
      %53 = dma.done [#allocation6], 128
    $region33: #{tpu_custom_call.1} parent=1 // pred_fallthru
      _
    %v54 = vld [vmem:[#allocation2] sm:$0xff]
    %v55 = vld [vmem:[#allocation2 + $0x8] sm:$0xff]
    %v56 = vld [vmem:[#allocation5] sm:$0xff]
    %vm57 = vcmask 261120
    %v58 = vsel %vm57, %v54, 0.0
    %59 = vadd.xlane.f32.xlu0 %v58
    %v60 = vpop.xlane.xlu0 %59
    %v61 = vsel %vm57, %v55, 0.0
    %62 = vadd.xlane.f32.xlu0 %v61
    %v63 = vpop.xlane.xlu0 %62
    %v64 = vrcp.pop 32.0
    %v65 = vmul.f32 32.0, %v64
    %v66 = vsub.f32 1.0, %v65
    %v67 = vmul.f32 %v64, %v66
    %v68 = vadd.f32 %v64, %v67
    %vm69 = vweird.f32 %v64
    %v70 = vsel %vm69, %v64, %v68
    %v71 = vmul.f32 %v60, %v70
    %v72 = vmul.f32 %v63, %v70
    %v73 = vsub.f32 %v54, %v71
    %v74 = vsub.f32 %v55, %v72
    %v75 = vmul.f32 %v73, %v73
    %v76 = vmul.f32 %v74, %v74
    %v77 = vsel %vm57, %v75, 0.0
    %78 = vadd.xlane.f32.xlu0 %v77
    %v79 = vpop.xlane.xlu0 %78
    %v80 = vsel %vm57, %v76, 0.0
    %81 = vadd.xlane.f32.xlu0 %v80
    %v82 = vpop.xlane.xlu0 %81
    %v83 = vrcp.pop 31.0
    %v84 = vmul.f32 31.0, %v83
    %v85 = vsub.f32 1.0, %v84
    %v86 = vmul.f32 %v83, %v85
    %v87 = vadd.f32 %v83, %v86
    %vm88 = vweird.f32 %v83
    %v89 = vsel %vm88, %v83, %v87
    %v90 = vmul.f32 %v79, %v89
    %v91 = vmul.f32 %v82, %v89
    %v92 = vrsqrt.pop %v90
    %v93 = vmul.f32 %v92, %v90
    %v94 = vmul.f32 %v93, %v92
    %v95 = vmul.f32 0.5, %v94
    %v96 = vsub.f32 1.5, %v95
    %v97 = vmul.f32 %v92, %v96
    %v98 = vmul.f32 %v90, %v97
    %vm99 = vcmp.eq.f32.partialorder %v90, inf
    %v100 = vsel %vm99, %v90, %v98
    %vm101 = vcmp.eq.f32.partialorder %v90, 0.0
    %v102 = vand.u32 %v90, 2147483648
    %v103 = vsel %vm101, %v102, %v100
    %v104 = vrsqrt.pop %v91
    %v105 = vmul.f32 %v104, %v91
    %v106 = vmul.f32 %v105, %v104
    %v107 = vmul.f32 0.5, %v106
    %v108 = vsub.f32 1.5, %v107
    %v109 = vmul.f32 %v104, %v108
    %v110 = vmul.f32 %v91, %v109
    %vm111 = vcmp.eq.f32.partialorder %v91, inf
    %v112 = vsel %vm111, %v91, %v110
    %vm113 = vcmp.eq.f32.partialorder %v91, 0.0
    %v114 = vand.u32 %v91, 2147483648
    %v115 = vsel %vm113, %v114, %v112
    %v116 = vperm.slane %v56, 0
    %v117 = vmul.f32 %v116, %v73
    %v118 = vmul.f32 %v116, %v74
    %v119 = vadd.f32 %v103, 1e-06
    %v120 = vadd.f32 %v115, 1e-06
    %v121 = vrcp.pop %v119
    %v122 = vmul.f32 %v119, %v121
    %v123 = vsub.f32 1.0, %v122
    %v124 = vmul.f32 %v121, %v123
    %v125 = vadd.f32 %v121, %v124
    %vm126 = vweird.f32 %v119
    %vm127 = vweird.f32 %v121
    %vm128 = vmor %vm126, %vm127
    %v129 = vsel %vm128, %v121, %v125
    %v130 = vand.u32 2147483647, %v119
    %vm131 = vcmp.eq.f32.partialorder %v130, 8.507059e+37
    %v132 = vand.u32 %v119, 2147483648
    %v133 = vor.u32 1.1754944e-38, %v132
    %v134 = vsel %vm131, %v133, %v129
    %v135 = vmul.f32 %v117, %v134
    %v136 = vrcp.pop %v120
    %v137 = vmul.f32 %v120, %v136
    %v138 = vsub.f32 1.0, %v137
    %v139 = vmul.f32 %v136, %v138
    %v140 = vadd.f32 %v136, %v139
    %vm141 = vweird.f32 %v120
    %vm142 = vweird.f32 %v136
    %vm143 = vmor %vm141, %vm142
    %v144 = vsel %vm143, %v136, %v140
    %v145 = vand.u32 2147483647, %v120
    %vm146 = vcmp.eq.f32.partialorder %v145, 8.507059e+37
    %v147 = vand.u32 %v120, 2147483648
    %v148 = vor.u32 1.1754944e-38, %v147
    %v149 = vsel %vm146, %v148, %v144
    %v150 = vmul.f32 %v118, %v149
    %v151 = vperm.slane %v56, 1
    %v152 = vadd.f32 %v135, %v151
    %v153 = vadd.f32 %v150, %v151
    %v154 = vld [vmem:[%s2] sm:$0xff]
    %v155 = vld [vmem:[%s2 + $0x8] sm:$0xff]
    %v156 = vld [vmem:[%s2 + $0x10] sm:$0xff]
    %v157 = vld [vmem:[%s2 + $0x18] sm:$0xff]
    %v158 = vperm.slane %v56, 4
    %v160 = vsel %vm57, %v152, 0
    %v163 = vsel %vm57, %v153, 0
    %165 = vmatpush.msra.mxu0 0.0
    %166 = vmatpush.msra.mxu0 0.0
    %167 = vmatpush.msra.mxu0 0.0
    %168 = vmatpush.msra.mxu0 0.0
    %169 = vmatpush.msra.mxu0 0.0
    %170 = vmatpush.msra.mxu0 0.0
    %171 = vmatpush.msra.mxu0 0.0
    %172 = vmatpush.msra.mxu0 0.0
    %173 = vmatpush.msra.mxu0 0.0
    %174 = vmatpush.msra.mxu0 0.0
    %175 = vmatpush.msra.mxu0 0.0
    %176 = vmatpush.msra.mxu0 0.0
    %177 = vmatpush.msra.mxu0 %v157
    %178 = vmatpush.msra.mxu0 %v156
    %179 = vmatpush.msra.mxu0 %v155
    %180 = vmatpush.msra.mxu0 %v154
    %181 = vmatmul.f32.gmra.mxu0 %v160
    %v182 = vpop.f32.mrf.mxu0
    %v183 = vadd.f32 %v158, %v182
    %184 = vmatmul.f32.gmra.mxu0 %v163
    %v185 = vpop.f32.mrf.mxu0
    %v186 = vadd.f32 %v158, %v185
    %187 = vdwg.mxu0
    %v188 = vld [vmem:[%s3] sm:$0xff]
    %v189 = vld [vmem:[%s3 + $0x8] sm:$0xff]
    %v190 = vld [vmem:[%s3 + $0x10] sm:$0xff]
    %v191 = vld [vmem:[%s3 + $0x18] sm:$0xff]
    %193 = vrot.lane.b32.xlu0 %v183, 96
    %v194 = vpop.permute.xlu0 %193
    %vm195 = vcmask 64512
    %v196 = vsel %vm195, %v183, 0
    %v198 = vsel %vm195, %v194, 0
    %200 = vmatpush.xpose.msra.mxu0 0.0
    %201 = vmatpush.xpose.msra.mxu0 0.0
    %202 = vmatpush.xpose.msra.mxu0 0.0
    %203 = vmatpush.xpose.msra.mxu0 0.0
    %204 = vmatpush.xpose.msra.mxu0 0.0
    %205 = vmatpush.xpose.msra.mxu0 0.0
    %206 = vmatpush.xpose.msra.mxu0 0.0
    %207 = vmatpush.xpose.msra.mxu0 0.0
    %208 = vmatpush.xpose.msra.mxu0 0.0
    %209 = vmatpush.xpose.msra.mxu0 0.0
    %210 = vmatpush.xpose.msra.mxu0 0.0
    %211 = vmatpush.xpose.msra.mxu0 0.0
    %212 = vmatpush.xpose.msra.mxu0 0.0
    %213 = vmatpush.xpose.msra.mxu0 0.0
    %214 = vmatpush.xpose.msra.mxu0 0.0
    %215 = vmatpush.xpose.msra.mxu0 %v198
    %216 = vmatmul.f32.gmra.mxu0 %v196
    %v217 = vpop.f32.mrf.mxu0
    %v218 = vadd.f32 0.0, %v217
    %219 = vdwg.mxu0
    %221 = vrot.lane.b32.xlu0 %v186, 96
    %v222 = vpop.permute.xlu0 %221
    %v223 = vsel %vm195, %v186, 0
    %v225 = vsel %vm195, %v222, 0
    %227 = vmatpush.xpose.msra.mxu0 0.0
    %228 = vmatpush.xpose.msra.mxu0 0.0
    %229 = vmatpush.xpose.msra.mxu0 0.0
    %230 = vmatpush.xpose.msra.mxu0 0.0
    %231 = vmatpush.xpose.msra.mxu0 0.0
    %232 = vmatpush.xpose.msra.mxu0 0.0
    %233 = vmatpush.xpose.msra.mxu0 0.0
    %234 = vmatpush.xpose.msra.mxu0 0.0
    %235 = vmatpush.xpose.msra.mxu0 0.0
    %236 = vmatpush.xpose.msra.mxu0 0.0
    %237 = vmatpush.xpose.msra.mxu0 0.0
    %238 = vmatpush.xpose.msra.mxu0 0.0
    %239 = vmatpush.xpose.msra.mxu0 0.0
    %240 = vmatpush.xpose.msra.mxu0 0.0
    %241 = vmatpush.xpose.msra.mxu0 0.0
    %242 = vmatpush.xpose.msra.mxu0 %v225
    %243 = vmatmul.f32.gmra.mxu0 %v223
    %v244 = vpop.f32.mrf.mxu0
    %v245 = vadd.f32 0.0, %v244
    %246 = vdwg.mxu0
    %v247 = vmul.f32 %v218, 0.35355338
    %v248 = vmul.f32 %v245, 0.35355338
    %v249 = vsel %vm195, %v247, -inf
    %250 = vmax.xlane.f32.xlu0 %v249
    %v251 = vpop.xlane.xlu0 %250
    %v252 = vsel %vm195, %v248, -inf
    %253 = vmax.xlane.f32.xlu0 %v252
    %v254 = vpop.xlane.xlu0 %253
    %v255 = vsub.f32 %v247, %v251
    %v256 = vsub.f32 %v248, %v254
    %v257 = vmul.f32 %v255, 1.442695
    %v258 = vpow.pop %v257
    %v259 = vmul.f32 %v256, 1.442695
    %v260 = vpow.pop %v259
    %v261 = vsel %vm195, %v258, 0.0
    %262 = vadd.xlane.f32.xlu0 %v261
    %v263 = vpop.xlane.xlu0 %262
    %v264 = vsel %vm195, %v260, 0.0
    %265 = vadd.xlane.f32.xlu0 %v264
    %v266 = vpop.xlane.xlu0 %265
    %v267 = vrcp.pop %v263
    %v268 = vmul.f32 %v263, %v267
    %v269 = vsub.f32 1.0, %v268
    %v270 = vmul.f32 %v267, %v269
    %v271 = vadd.f32 %v267, %v270
    %vm272 = vweird.f32 %v263
    %vm273 = vweird.f32 %v267
    %vm274 = vmor %vm272, %vm273
    %v275 = vsel %vm274, %v267, %v271
    %v276 = vand.u32 2147483647, %v263
    %vm277 = vcmp.eq.f32.partialorder %v276, 8.507059e+37
    %v278 = vand.u32 %v263, 2147483648
    %v279 = vor.u32 1.1754944e-38, %v278
    %v280 = vsel %vm277, %v279, %v275
    %v281 = vrcp.pop %v266
    %v282 = vmul.f32 %v266, %v281
    %v283 = vsub.f32 1.0, %v282
    %v284 = vmul.f32 %v281, %v283
    %v285 = vadd.f32 %v281, %v284
    %vm286 = vweird.f32 %v266
    %vm287 = vweird.f32 %v281
    %vm288 = vmor %vm286, %vm287
    %v289 = vsel %vm288, %v281, %v285
    %v290 = vand.u32 2147483647, %v266
    %vm291 = vcmp.eq.f32.partialorder %v290, 8.507059e+37
    %v292 = vand.u32 %v266, 2147483648
    %v293 = vor.u32 1.1754944e-38, %v292
    %v294 = vsel %vm291, %v293, %v289
    %v295 = vmul.f32 %v258, %v280
    %v296 = vmul.f32 %v260, %v294
    %297 = vrot.lane.b32.xlu0 %v183, 64
    %v298 = vpop.permute.xlu0 %297
    %v301 = vsel %vm195, %v295, 0
    %303 = vmatpush.msra.mxu0 0.0
    %304 = vmatpush.msra.mxu0 0.0
    %305 = vmatpush.msra.mxu0 0.0
    %306 = vmatpush.msra.mxu0 0.0
    %307 = vmatpush.msra.mxu0 0.0
    %308 = vmatpush.msra.mxu0 0.0
    %309 = vmatpush.msra.mxu0 0.0
    %310 = vmatpush.msra.mxu0 0.0
    %311 = vmatpush.msra.mxu0 0.0
    %312 = vmatpush.msra.mxu0 0.0
    %313 = vmatpush.msra.mxu0 0.0
    %314 = vmatpush.msra.mxu0 0.0
    %315 = vmatpush.msra.mxu0 0.0
    %316 = vmatpush.msra.mxu0 0.0
    %317 = vmatpush.msra.mxu0 0.0
    %318 = vmatpush.msra.mxu0 %v298
    %319 = vmatmul.f32.gmra.mxu0 %v301
    %v320 = vpop.f32.mrf.mxu0
    %v321 = vadd.f32 0.0, %v320
    %322 = vdwg.mxu0
    %323 = vrot.lane.b32.xlu0 %v186, 64
    %v324 = vpop.permute.xlu0 %323
    %v327 = vsel %vm195, %v296, 0
    %329 = vmatpush.msra.mxu0 0.0
    %330 = vmatpush.msra.mxu0 0.0
    %331 = vmatpush.msra.mxu0 0.0
    %332 = vmatpush.msra.mxu0 0.0
    %333 = vmatpush.msra.mxu0 0.0
    %334 = vmatpush.msra.mxu0 0.0
    %335 = vmatpush.msra.mxu0 0.0
    %336 = vmatpush.msra.mxu0 0.0
    %337 = vmatpush.msra.mxu0 0.0
    %338 = vmatpush.msra.mxu0 0.0
    %339 = vmatpush.msra.mxu0 0.0
    %340 = vmatpush.msra.mxu0 0.0
    %341 = vmatpush.msra.mxu0 0.0
    %342 = vmatpush.msra.mxu0 0.0
    %343 = vmatpush.msra.mxu0 0.0
    %344 = vmatpush.msra.mxu0 %v324
    %345 = vmatmul.f32.gmra.mxu0 %v327
    %v346 = vpop.f32.mrf.mxu0
    %v347 = vadd.f32 0.0, %v346
    %348 = vdwg.mxu0
    %349 = vrot.lane.b32.xlu0 %v183, 120
    %v350 = vpop.permute.xlu0 %349
    %351 = vrot.lane.b32.xlu0 %v183, 88
    %v352 = vpop.permute.xlu0 %351
    %v353 = vsel %vm195, %v350, 0
    %v355 = vsel %vm195, %v352, 0
    %357 = vmatpush.xpose.msra.mxu0 0.0
    %358 = vmatpush.xpose.msra.mxu0 0.0
    %359 = vmatpush.xpose.msra.mxu0 0.0
    %360 = vmatpush.xpose.msra.mxu0 0.0
    %361 = vmatpush.xpose.msra.mxu0 0.0
    %362 = vmatpush.xpose.msra.mxu0 0.0
    %363 = vmatpush.xpose.msra.mxu0 0.0
    %364 = vmatpush.xpose.msra.mxu0 0.0
    %365 = vmatpush.xpose.msra.mxu0 0.0
    %366 = vmatpush.xpose.msra.mxu0 0.0
    %367 = vmatpush.xpose.msra.mxu0 0.0
    %368 = vmatpush.xpose.msra.mxu0 0.0
    %369 = vmatpush.xpose.msra.mxu0 0.0
    %370 = vmatpush.xpose.msra.mxu0 0.0
    %371 = vmatpush.xpose.msra.mxu0 0.0
    %372 = vmatpush.xpose.msra.mxu0 %v355
    %373 = vmatmul.f32.gmra.mxu0 %v353
    %v374 = vpop.f32.mrf.mxu0
    %v375 = vadd.f32 0.0, %v374
    %376 = vdwg.mxu0
    %377 = vrot.lane.b32.xlu0 %v186, 120
    %v378 = vpop.permute.xlu0 %377
    %379 = vrot.lane.b32.xlu0 %v186, 88
    %v380 = vpop.permute.xlu0 %379
    %v381 = vsel %vm195, %v378, 0
    %v383 = vsel %vm195, %v380, 0
    %385 = vmatpush.xpose.msra.mxu0 0.0
    %386 = vmatpush.xpose.msra.mxu0 0.0
    %387 = vmatpush.xpose.msra.mxu0 0.0
    %388 = vmatpush.xpose.msra.mxu0 0.0
    %389 = vmatpush.xpose.msra.mxu0 0.0
    %390 = vmatpush.xpose.msra.mxu0 0.0
    %391 = vmatpush.xpose.msra.mxu0 0.0
    %392 = vmatpush.xpose.msra.mxu0 0.0
    %393 = vmatpush.xpose.msra.mxu0 0.0
    %394 = vmatpush.xpose.msra.mxu0 0.0
    %395 = vmatpush.xpose.msra.mxu0 0.0
    %396 = vmatpush.xpose.msra.mxu0 0.0
    %397 = vmatpush.xpose.msra.mxu0 0.0
    %398 = vmatpush.xpose.msra.mxu0 0.0
    %399 = vmatpush.xpose.msra.mxu0 0.0
    %400 = vmatpush.xpose.msra.mxu0 %v383
    %401 = vmatmul.f32.gmra.mxu0 %v381
    %v402 = vpop.f32.mrf.mxu0
    %v403 = vadd.f32 0.0, %v402
    %404 = vdwg.mxu0
    %v405 = vmul.f32 %v375, 0.35355338
    %v406 = vmul.f32 %v403, 0.35355338
    %v407 = vsel %vm195, %v405, -inf
    %408 = vmax.xlane.f32.xlu0 %v407
    %v409 = vpop.xlane.xlu0 %408
    %v410 = vsel %vm195, %v406, -inf
    %411 = vmax.xlane.f32.xlu0 %v410
    %v412 = vpop.xlane.xlu0 %411
    %v413 = vsub.f32 %v405, %v409
    %v414 = vsub.f32 %v406, %v412
    %v415 = vmul.f32 %v413, 1.442695
    %v416 = vpow.pop %v415
    %v417 = vmul.f32 %v414, 1.442695
    %v418 = vpow.pop %v417
    %v419 = vsel %vm195, %v416, 0.0
    %420 = vadd.xlane.f32.xlu0 %v419
    %v421 = vpop.xlane.xlu0 %420
    %v422 = vsel %vm195, %v418, 0.0
    %423 = vadd.xlane.f32.xlu0 %v422
    %v424 = vpop.xlane.xlu0 %423
    %v425 = vrcp.pop %v421
    %v426 = vmul.f32 %v421, %v425
    %v427 = vsub.f32 1.0, %v426
    %v428 = vmul.f32 %v425, %v427
    %v429 = vadd.f32 %v425, %v428
    %vm430 = vweird.f32 %v421
    %vm431 = vweird.f32 %v425
    %vm432 = vmor %vm430, %vm431
    %v433 = vsel %vm432, %v425, %v429
    %v434 = vand.u32 2147483647, %v421
    %vm435 = vcmp.eq.f32.partialorder %v434, 8.507059e+37
    %v436 = vand.u32 %v421, 2147483648
    %v437 = vor.u32 1.1754944e-38, %v436
    %v438 = vsel %vm435, %v437, %v433
    %v439 = vrcp.pop %v424
    %v440 = vmul.f32 %v424, %v439
    %v441 = vsub.f32 1.0, %v440
    %v442 = vmul.f32 %v439, %v441
    %v443 = vadd.f32 %v439, %v442
    %vm444 = vweird.f32 %v424
    %vm445 = vweird.f32 %v439
    %vm446 = vmor %vm444, %vm445
    %v447 = vsel %vm446, %v439, %v443
    %v448 = vand.u32 2147483647, %v424
    %vm449 = vcmp.eq.f32.partialorder %v448, 8.507059e+37
    %v450 = vand.u32 %v424, 2147483648
    %v451 = vor.u32 1.1754944e-38, %v450
    %v452 = vsel %vm449, %v451, %v447
    %v453 = vmul.f32 %v416, %v438
    %v454 = vmul.f32 %v418, %v452
    %455 = vrot.lane.b32.xlu0 %v183, 56
    %v456 = vpop.permute.xlu0 %455
    %v459 = vsel %vm195, %v453, 0
    %461 = vmatpush.msra.mxu0 0.0
    %462 = vmatpush.msra.mxu0 0.0
    %463 = vmatpush.msra.mxu0 0.0
    %464 = vmatpush.msra.mxu0 0.0
    %465 = vmatpush.msra.mxu0 0.0
    %466 = vmatpush.msra.mxu0 0.0
    %467 = vmatpush.msra.mxu0 0.0
    %468 = vmatpush.msra.mxu0 0.0
    %469 = vmatpush.msra.mxu0 0.0
    %470 = vmatpush.msra.mxu0 0.0
    %471 = vmatpush.msra.mxu0 0.0
    %472 = vmatpush.msra.mxu0 0.0
    %473 = vmatpush.msra.mxu0 0.0
    %474 = vmatpush.msra.mxu0 0.0
    %475 = vmatpush.msra.mxu0 0.0
    %476 = vmatpush.msra.mxu0 %v456
    %477 = vmatmul.f32.gmra.mxu0 %v459
    %v478 = vpop.f32.mrf.mxu0
    %v479 = vadd.f32 0.0, %v478
    %480 = vdwg.mxu0
    %481 = vrot.lane.b32.xlu0 %v186, 56
    %v482 = vpop.permute.xlu0 %481
    %v485 = vsel %vm195, %v454, 0
    %487 = vmatpush.msra.mxu0 0.0
    %488 = vmatpush.msra.mxu0 0.0
    %489 = vmatpush.msra.mxu0 0.0
    %490 = vmatpush.msra.mxu0 0.0
    %491 = vmatpush.msra.mxu0 0.0
    %492 = vmatpush.msra.mxu0 0.0
    %493 = vmatpush.msra.mxu0 0.0
    %494 = vmatpush.msra.mxu0 0.0
    %495 = vmatpush.msra.mxu0 0.0
    %496 = vmatpush.msra.mxu0 0.0
    %497 = vmatpush.msra.mxu0 0.0
    %498 = vmatpush.msra.mxu0 0.0
    %499 = vmatpush.msra.mxu0 0.0
    %500 = vmatpush.msra.mxu0 0.0
    %501 = vmatpush.msra.mxu0 0.0
    %502 = vmatpush.msra.mxu0 %v482
    %503 = vmatmul.f32.gmra.mxu0 %v485
    %v504 = vpop.f32.mrf.mxu0
    %v505 = vadd.f32 0.0, %v504
    %506 = vdwg.mxu0
    %v508 = vsel %vm195, %v479, 0
    %v511 = vsel %vm195, %v505, 0
    %513 = vmatpush.msra.mxu0 0.0
    %514 = vmatpush.msra.mxu0 0.0
    %515 = vmatpush.msra.mxu0 0.0
    %516 = vmatpush.msra.mxu0 0.0
    %517 = vmatpush.msra.mxu0 0.0
    %518 = vmatpush.msra.mxu0 0.0
    %519 = vmatpush.msra.mxu0 0.0
    %520 = vmatpush.msra.mxu0 0.0
    %521 = vmatpush.msra.mxu0 0.0
    %522 = vmatpush.msra.mxu0 0.0
    %523 = vmatpush.msra.mxu0 0.0
    %524 = vmatpush.msra.mxu0 0.0
    %525 = vmatpush.msra.mxu0 0.0
    %526 = vmatpush.msra.mxu0 0.0
    %527 = vmatpush.msra.mxu0 0.0
    %528 = vmatpush.msra.mxu0 %v189
    %529 = vmatmul.f32.gmra.mxu0 %v508
    %v530 = vpop.f32.mrf.mxu0
    %v531 = vadd.f32 0.0, %v530
    %532 = vmatmul.f32.gmra.mxu0 %v511
    %v533 = vpop.f32.mrf.mxu0
    %v534 = vadd.f32 0.0, %v533
    %535 = vdwg.mxu0
    %v537 = vsel %vm195, %v321, 0
    %v540 = vsel %vm195, %v347, 0
    %542 = vmatpush.msra.mxu0 0.0
    %543 = vmatpush.msra.mxu0 0.0
    %544 = vmatpush.msra.mxu0 0.0
    %545 = vmatpush.msra.mxu0 0.0
    %546 = vmatpush.msra.mxu0 0.0
    %547 = vmatpush.msra.mxu0 0.0
    %548 = vmatpush.msra.mxu0 0.0
    %549 = vmatpush.msra.mxu0 0.0
    %550 = vmatpush.msra.mxu0 0.0
    %551 = vmatpush.msra.mxu0 0.0
    %552 = vmatpush.msra.mxu0 0.0
    %553 = vmatpush.msra.mxu0 0.0
    %554 = vmatpush.msra.mxu0 0.0
    %555 = vmatpush.msra.mxu0 0.0
    %556 = vmatpush.msra.mxu0 0.0
    %557 = vmatpush.msra.mxu0 %v188
    %558 = vmatmul.f32.gmra.mxu0 %v537
    %v559 = vpop.f32.mrf.mxu0
    %v560 = vadd.f32 %v531, %v559
    %561 = vmatmul.f32.gmra.mxu0 %v540
    %v562 = vpop.f32.mrf.mxu0
    %v563 = vadd.f32 %v534, %v562
    %564 = vdwg.mxu0
    %565 = vrot.lane.b32.xlu0 %v183, 112
    %v566 = vpop.permute.xlu0 %565
    %567 = vrot.lane.b32.xlu0 %v183, 80
    %v568 = vpop.permute.xlu0 %567
    %v569 = vsel %vm195, %v566, 0
    %v571 = vsel %vm195, %v568, 0
    %573 = vmatpush.xpose.msra.mxu0 0.0
    %574 = vmatpush.xpose.msra.mxu0 0.0
    %575 = vmatpush.xpose.msra.mxu0 0.0
    %576 = vmatpush.xpose.msra.mxu0 0.0
    %577 = vmatpush.xpose.msra.mxu0 0.0
    %578 = vmatpush.xpose.msra.mxu0 0.0
    %579 = vmatpush.xpose.msra.mxu0 0.0
    %580 = vmatpush.xpose.msra.mxu0 0.0
    %581 = vmatpush.xpose.msra.mxu0 0.0
    %582 = vmatpush.xpose.msra.mxu0 0.0
    %583 = vmatpush.xpose.msra.mxu0 0.0
    %584 = vmatpush.xpose.msra.mxu0 0.0
    %585 = vmatpush.xpose.msra.mxu0 0.0
    %586 = vmatpush.xpose.msra.mxu0 0.0
    %587 = vmatpush.xpose.msra.mxu0 0.0
    %588 = vmatpush.xpose.msra.mxu0 %v571
    %589 = vmatmul.f32.gmra.mxu0 %v569
    %v590 = vpop.f32.mrf.mxu0
    %v591 = vadd.f32 0.0, %v590
    %592 = vdwg.mxu0
    %593 = vrot.lane.b32.xlu0 %v186, 112
    %v594 = vpop.permute.xlu0 %593
    %595 = vrot.lane.b32.xlu0 %v186, 80
    %v596 = vpop.permute.xlu0 %595
    %v597 = vsel %vm195, %v594, 0
    %v599 = vsel %vm195, %v596, 0
    %601 = vmatpush.xpose.msra.mxu0 0.0
    %602 = vmatpush.xpose.msra.mxu0 0.0
    %603 = vmatpush.xpose.msra.mxu0 0.0
    %604 = vmatpush.xpose.msra.mxu0 0.0
    %605 = vmatpush.xpose.msra.mxu0 0.0
    %606 = vmatpush.xpose.msra.mxu0 0.0
    %607 = vmatpush.xpose.msra.mxu0 0.0
    %608 = vmatpush.xpose.msra.mxu0 0.0
    %609 = vmatpush.xpose.msra.mxu0 0.0
    %610 = vmatpush.xpose.msra.mxu0 0.0
    %611 = vmatpush.xpose.msra.mxu0 0.0
    %612 = vmatpush.xpose.msra.mxu0 0.0
    %613 = vmatpush.xpose.msra.mxu0 0.0
    %614 = vmatpush.xpose.msra.mxu0 0.0
    %615 = vmatpush.xpose.msra.mxu0 0.0
    %616 = vmatpush.xpose.msra.mxu0 %v599
    %617 = vmatmul.f32.gmra.mxu0 %v597
    %v618 = vpop.f32.mrf.mxu0
    %v619 = vadd.f32 0.0, %v618
    %620 = vdwg.mxu0
    %v621 = vmul.f32 %v591, 0.35355338
    %v622 = vmul.f32 %v619, 0.35355338
    %v623 = vsel %vm195, %v621, -inf
    %624 = vmax.xlane.f32.xlu0 %v623
    %v625 = vpop.xlane.xlu0 %624
    %v626 = vsel %vm195, %v622, -inf
    %627 = vmax.xlane.f32.xlu0 %v626
    %v628 = vpop.xlane.xlu0 %627
    %v629 = vsub.f32 %v621, %v625
    %v630 = vsub.f32 %v622, %v628
    %v631 = vmul.f32 %v629, 1.442695
    %v632 = vpow.pop %v631
    %v633 = vmul.f32 %v630, 1.442695
    %v634 = vpow.pop %v633
    %v635 = vsel %vm195, %v632, 0.0
    %636 = vadd.xlane.f32.xlu0 %v635
    %v637 = vpop.xlane.xlu0 %636
    %v638 = vsel %vm195, %v634, 0.0
    %639 = vadd.xlane.f32.xlu0 %v638
    %v640 = vpop.xlane.xlu0 %639
    %v641 = vrcp.pop %v637
    %v642 = vmul.f32 %v637, %v641
    %v643 = vsub.f32 1.0, %v642
    %v644 = vmul.f32 %v641, %v643
    %v645 = vadd.f32 %v641, %v644
    %vm646 = vweird.f32 %v637
    %vm647 = vweird.f32 %v641
    %vm648 = vmor %vm646, %vm647
    %v649 = vsel %vm648, %v641, %v645
    %v650 = vand.u32 2147483647, %v637
    %vm651 = vcmp.eq.f32.partialorder %v650, 8.507059e+37
    %v652 = vand.u32 %v637, 2147483648
    %v653 = vor.u32 1.1754944e-38, %v652
    %v654 = vsel %vm651, %v653, %v649
    %v655 = vrcp.pop %v640
    %v656 = vmul.f32 %v640, %v655
    %v657 = vsub.f32 1.0, %v656
    %v658 = vmul.f32 %v655, %v657
    %v659 = vadd.f32 %v655, %v658
    %vm660 = vweird.f32 %v640
    %vm661 = vweird.f32 %v655
    %vm662 = vmor %vm660, %vm661
    %v663 = vsel %vm662, %v655, %v659
    %v664 = vand.u32 2147483647, %v640
    %vm665 = vcmp.eq.f32.partialorder %v664, 8.507059e+37
    %v666 = vand.u32 %v640, 2147483648
    %v667 = vor.u32 1.1754944e-38, %v666
    %v668 = vsel %vm665, %v667, %v663
    %v669 = vmul.f32 %v632, %v654
    %v670 = vmul.f32 %v634, %v668
    %671 = vrot.lane.b32.xlu0 %v183, 48
    %v672 = vpop.permute.xlu0 %671
    %v675 = vsel %vm195, %v669, 0
    %677 = vmatpush.msra.mxu0 0.0
    %678 = vmatpush.msra.mxu0 0.0
    %679 = vmatpush.msra.mxu0 0.0
    %680 = vmatpush.msra.mxu0 0.0
    %681 = vmatpush.msra.mxu0 0.0
    %682 = vmatpush.msra.mxu0 0.0
    %683 = vmatpush.msra.mxu0 0.0
    %684 = vmatpush.msra.mxu0 0.0
    %685 = vmatpush.msra.mxu0 0.0
    %686 = vmatpush.msra.mxu0 0.0
    %687 = vmatpush.msra.mxu0 0.0
    %688 = vmatpush.msra.mxu0 0.0
    %689 = vmatpush.msra.mxu0 0.0
    %690 = vmatpush.msra.mxu0 0.0
    %691 = vmatpush.msra.mxu0 0.0
    %692 = vmatpush.msra.mxu0 %v672
    %693 = vmatmul.f32.gmra.mxu0 %v675
    %v694 = vpop.f32.mrf.mxu0
    %v695 = vadd.f32 0.0, %v694
    %696 = vdwg.mxu0
    %697 = vrot.lane.b32.xlu0 %v186, 48
    %v698 = vpop.permute.xlu0 %697
    %v701 = vsel %vm195, %v670, 0
    %703 = vmatpush.msra.mxu0 0.0
    %704 = vmatpush.msra.mxu0 0.0
    %705 = vmatpush.msra.mxu0 0.0
    %706 = vmatpush.msra.mxu0 0.0
    %707 = vmatpush.msra.mxu0 0.0
    %708 = vmatpush.msra.mxu0 0.0
    %709 = vmatpush.msra.mxu0 0.0
    %710 = vmatpush.msra.mxu0 0.0
    %711 = vmatpush.msra.mxu0 0.0
    %712 = vmatpush.msra.mxu0 0.0
    %713 = vmatpush.msra.mxu0 0.0
    %714 = vmatpush.msra.mxu0 0.0
    %715 = vmatpush.msra.mxu0 0.0
    %716 = vmatpush.msra.mxu0 0.0
    %717 = vmatpush.msra.mxu0 0.0
    %718 = vmatpush.msra.mxu0 %v698
    %719 = vmatmul.f32.gmra.mxu0 %v701
    %v720 = vpop.f32.mrf.mxu0
    %v721 = vadd.f32 0.0, %v720
    %722 = vdwg.mxu0
    %v724 = vsel %vm195, %v695, 0
    %v727 = vsel %vm195, %v721, 0
    %729 = vmatpush.msra.mxu0 0.0
    %730 = vmatpush.msra.mxu0 0.0
    %731 = vmatpush.msra.mxu0 0.0
    %732 = vmatpush.msra.mxu0 0.0
    %733 = vmatpush.msra.mxu0 0.0
    %734 = vmatpush.msra.mxu0 0.0
    %735 = vmatpush.msra.mxu0 0.0
    %736 = vmatpush.msra.mxu0 0.0
    %737 = vmatpush.msra.mxu0 0.0
    %738 = vmatpush.msra.mxu0 0.0
    %739 = vmatpush.msra.mxu0 0.0
    %740 = vmatpush.msra.mxu0 0.0
    %741 = vmatpush.msra.mxu0 0.0
    %742 = vmatpush.msra.mxu0 0.0
    %743 = vmatpush.msra.mxu0 0.0
    %744 = vmatpush.msra.mxu0 %v190
    %745 = vmatmul.f32.gmra.mxu0 %v724
    %v746 = vpop.f32.mrf.mxu0
    %v747 = vadd.f32 0.0, %v746
    %748 = vmatmul.f32.gmra.mxu0 %v727
    %v749 = vpop.f32.mrf.mxu0
    %v750 = vadd.f32 0.0, %v749
    %751 = vdwg.mxu0
    %v752 = vadd.f32 %v560, %v747
    %v753 = vadd.f32 %v563, %v750
    %754 = vrot.lane.b32.xlu0 %v183, 104
    %v755 = vpop.permute.xlu0 %754
    %756 = vrot.lane.b32.xlu0 %v183, 72
    %v757 = vpop.permute.xlu0 %756
    %v758 = vsel %vm195, %v755, 0
    %v760 = vsel %vm195, %v757, 0
    %762 = vmatpush.xpose.msra.mxu0 0.0
    %763 = vmatpush.xpose.msra.mxu0 0.0
    %764 = vmatpush.xpose.msra.mxu0 0.0
    %765 = vmatpush.xpose.msra.mxu0 0.0
    %766 = vmatpush.xpose.msra.mxu0 0.0
    %767 = vmatpush.xpose.msra.mxu0 0.0
    %768 = vmatpush.xpose.msra.mxu0 0.0
    %769 = vmatpush.xpose.msra.mxu0 0.0
    %770 = vmatpush.xpose.msra.mxu0 0.0
    %771 = vmatpush.xpose.msra.mxu0 0.0
    %772 = vmatpush.xpose.msra.mxu0 0.0
    %773 = vmatpush.xpose.msra.mxu0 0.0
    %774 = vmatpush.xpose.msra.mxu0 0.0
    %775 = vmatpush.xpose.msra.mxu0 0.0
    %776 = vmatpush.xpose.msra.mxu0 0.0
    %777 = vmatpush.xpose.msra.mxu0 %v760
    %778 = vmatmul.f32.gmra.mxu0 %v758
    %v779 = vpop.f32.mrf.mxu0
    %v780 = vadd.f32 0.0, %v779
    %781 = vdwg.mxu0
    %782 = vrot.lane.b32.xlu0 %v186, 104
    %v783 = vpop.permute.xlu0 %782
    %784 = vrot.lane.b32.xlu0 %v186, 72
    %v785 = vpop.permute.xlu0 %784
    %v786 = vsel %vm195, %v783, 0
    %v788 = vsel %vm195, %v785, 0
    %790 = vmatpush.xpose.msra.mxu0 0.0
    %791 = vmatpush.xpose.msra.mxu0 0.0
    %792 = vmatpush.xpose.msra.mxu0 0.0
    %793 = vmatpush.xpose.msra.mxu0 0.0
    %794 = vmatpush.xpose.msra.mxu0 0.0
    %795 = vmatpush.xpose.msra.mxu0 0.0
    %796 = vmatpush.xpose.msra.mxu0 0.0
    %797 = vmatpush.xpose.msra.mxu0 0.0
    %798 = vmatpush.xpose.msra.mxu0 0.0
    %799 = vmatpush.xpose.msra.mxu0 0.0
    %800 = vmatpush.xpose.msra.mxu0 0.0
    %801 = vmatpush.xpose.msra.mxu0 0.0
    %802 = vmatpush.xpose.msra.mxu0 0.0
    %803 = vmatpush.xpose.msra.mxu0 0.0
    %804 = vmatpush.xpose.msra.mxu0 0.0
    %805 = vmatpush.xpose.msra.mxu0 %v788
    %806 = vmatmul.f32.gmra.mxu0 %v786
    %v807 = vpop.f32.mrf.mxu0
    %v808 = vadd.f32 0.0, %v807
    %809 = vdwg.mxu0
    %v810 = vmul.f32 %v780, 0.35355338
    %v811 = vmul.f32 %v808, 0.35355338
    %v812 = vsel %vm195, %v810, -inf
    %813 = vmax.xlane.f32.xlu0 %v812
    %v814 = vpop.xlane.xlu0 %813
    %v815 = vsel %vm195, %v811, -inf
    %816 = vmax.xlane.f32.xlu0 %v815
    %v817 = vpop.xlane.xlu0 %816
    %v818 = vsub.f32 %v810, %v814
    %v819 = vsub.f32 %v811, %v817
    %v820 = vmul.f32 %v818, 1.442695
    %v821 = vpow.pop %v820
    %v822 = vmul.f32 %v819, 1.442695
    %v823 = vpow.pop %v822
    %v824 = vsel %vm195, %v821, 0.0
    %825 = vadd.xlane.f32.xlu0 %v824
    %v826 = vpop.xlane.xlu0 %825
    %v827 = vsel %vm195, %v823, 0.0
    %828 = vadd.xlane.f32.xlu0 %v827
    %v829 = vpop.xlane.xlu0 %828
    %v830 = vrcp.pop %v826
    %v831 = vmul.f32 %v826, %v830
    %v832 = vsub.f32 1.0, %v831
    %v833 = vmul.f32 %v830, %v832
    %v834 = vadd.f32 %v830, %v833
    %vm835 = vweird.f32 %v826
    %vm836 = vweird.f32 %v830
    %vm837 = vmor %vm835, %vm836
    %v838 = vsel %vm837, %v830, %v834
    %v839 = vand.u32 2147483647, %v826
    %vm840 = vcmp.eq.f32.partialorder %v839, 8.507059e+37
    %v841 = vand.u32 %v826, 2147483648
    %v842 = vor.u32 1.1754944e-38, %v841
    %v843 = vsel %vm840, %v842, %v838
    %v844 = vrcp.pop %v829
    %v845 = vmul.f32 %v829, %v844
    %v846 = vsub.f32 1.0, %v845
    %v847 = vmul.f32 %v844, %v846
    %v848 = vadd.f32 %v844, %v847
    %vm849 = vweird.f32 %v829
    %vm850 = vweird.f32 %v844
    %vm851 = vmor %vm849, %vm850
    %v852 = vsel %vm851, %v844, %v848
    %v853 = vand.u32 2147483647, %v829
    %vm854 = vcmp.eq.f32.partialorder %v853, 8.507059e+37
    %v855 = vand.u32 %v829, 2147483648
    %v856 = vor.u32 1.1754944e-38, %v855
    %v857 = vsel %vm854, %v856, %v852
    %v858 = vmul.f32 %v821, %v843
    %v859 = vmul.f32 %v823, %v857
    %860 = vrot.lane.b32.xlu0 %v183, 40
    %v861 = vpop.permute.xlu0 %860
    %v864 = vsel %vm195, %v858, 0
    %866 = vmatpush.msra.mxu0 0.0
    %867 = vmatpush.msra.mxu0 0.0
    %868 = vmatpush.msra.mxu0 0.0
    %869 = vmatpush.msra.mxu0 0.0
    %870 = vmatpush.msra.mxu0 0.0
    %871 = vmatpush.msra.mxu0 0.0
    %872 = vmatpush.msra.mxu0 0.0
    %873 = vmatpush.msra.mxu0 0.0
    %874 = vmatpush.msra.mxu0 0.0
    %875 = vmatpush.msra.mxu0 0.0
    %876 = vmatpush.msra.mxu0 0.0
    %877 = vmatpush.msra.mxu0 0.0
    %878 = vmatpush.msra.mxu0 0.0
    %879 = vmatpush.msra.mxu0 0.0
    %880 = vmatpush.msra.mxu0 0.0
    %881 = vmatpush.msra.mxu0 %v861
    %882 = vmatmul.f32.gmra.mxu0 %v864
    %v883 = vpop.f32.mrf.mxu0
    %v884 = vadd.f32 0.0, %v883
    %885 = vdwg.mxu0
    %886 = vrot.lane.b32.xlu0 %v186, 40
    %v887 = vpop.permute.xlu0 %886
    %v890 = vsel %vm195, %v859, 0
    %892 = vmatpush.msra.mxu0 0.0
    %893 = vmatpush.msra.mxu0 0.0
    %894 = vmatpush.msra.mxu0 0.0
    %895 = vmatpush.msra.mxu0 0.0
    %896 = vmatpush.msra.mxu0 0.0
    %897 = vmatpush.msra.mxu0 0.0
    %898 = vmatpush.msra.mxu0 0.0
    %899 = vmatpush.msra.mxu0 0.0
    %900 = vmatpush.msra.mxu0 0.0
    %901 = vmatpush.msra.mxu0 0.0
    %902 = vmatpush.msra.mxu0 0.0
    %903 = vmatpush.msra.mxu0 0.0
    %904 = vmatpush.msra.mxu0 0.0
    %905 = vmatpush.msra.mxu0 0.0
    %906 = vmatpush.msra.mxu0 0.0
    %907 = vmatpush.msra.mxu0 %v887
    %908 = vmatmul.f32.gmra.mxu0 %v890
    %v909 = vpop.f32.mrf.mxu0
    %v910 = vadd.f32 0.0, %v909
    %911 = vdwg.mxu0
    %v913 = vsel %vm195, %v884, 0
    %v916 = vsel %vm195, %v910, 0
    %918 = vmatpush.msra.mxu0 0.0
    %919 = vmatpush.msra.mxu0 0.0
    %920 = vmatpush.msra.mxu0 0.0
    %921 = vmatpush.msra.mxu0 0.0
    %922 = vmatpush.msra.mxu0 0.0
    %923 = vmatpush.msra.mxu0 0.0
    %924 = vmatpush.msra.mxu0 0.0
    %925 = vmatpush.msra.mxu0 0.0
    %926 = vmatpush.msra.mxu0 0.0
    %927 = vmatpush.msra.mxu0 0.0
    %928 = vmatpush.msra.mxu0 0.0
    %929 = vmatpush.msra.mxu0 0.0
    %930 = vmatpush.msra.mxu0 0.0
    %931 = vmatpush.msra.mxu0 0.0
    %932 = vmatpush.msra.mxu0 0.0
    %933 = vmatpush.msra.mxu0 %v191
    %934 = vmatmul.f32.gmra.mxu0 %v913
    %v935 = vpop.f32.mrf.mxu0
    %v936 = vadd.f32 0.0, %v935
    %937 = vmatmul.f32.gmra.mxu0 %v916
    %v938 = vpop.f32.mrf.mxu0
    %v939 = vadd.f32 0.0, %v938
    %940 = vdwg.mxu0
    %v941 = vadd.f32 %v752, %v936
    %v942 = vadd.f32 %v753, %v939
    %v943 = vadd.f32 %v54, %v941
    %v944 = vadd.f32 %v55, %v942
    %v945 = vperm.slane %v56, 5
    %v946 = vadd.f32 %v943, %v945
    %v947 = vadd.f32 %v944, %v945
    %v948 = vsel %vm57, %v946, 0.0
    %949 = vadd.xlane.f32.xlu0 %v948
    %v950 = vpop.xlane.xlu0 %949
    %v951 = vsel %vm57, %v947, 0.0
    %952 = vadd.xlane.f32.xlu0 %v951
    %v953 = vpop.xlane.xlu0 %952
    %v954 = vmul.f32 %v950, %v70
    %v955 = vmul.f32 %v953, %v70
    %v956 = vsub.f32 %v946, %v954
    %v957 = vsub.f32 %v947, %v955
    %v958 = vmul.f32 %v956, %v956
    %v959 = vmul.f32 %v957, %v957
    %v960 = vsel %vm57, %v958, 0.0
    %961 = vadd.xlane.f32.xlu0 %v960
    %v962 = vpop.xlane.xlu0 %961
    %v963 = vsel %vm57, %v959, 0.0
    %964 = vadd.xlane.f32.xlu0 %v963
    %v965 = vpop.xlane.xlu0 %964
    %v966 = vmul.f32 %v962, %v89
    %v967 = vmul.f32 %v965, %v89
    %v968 = vrsqrt.pop %v966
    %v969 = vmul.f32 %v968, %v966
    %v970 = vmul.f32 %v969, %v968
    %v971 = vmul.f32 0.5, %v970
    %v972 = vsub.f32 1.5, %v971
    %v973 = vmul.f32 %v968, %v972
    %v974 = vmul.f32 %v966, %v973
    %vm975 = vcmp.eq.f32.partialorder %v966, inf
    %v976 = vsel %vm975, %v966, %v974
    %vm977 = vcmp.eq.f32.partialorder %v966, 0.0
    %v978 = vand.u32 %v966, 2147483648
    %v979 = vsel %vm977, %v978, %v976
    %v980 = vrsqrt.pop %v967
    %v981 = vmul.f32 %v980, %v967
    %v982 = vmul.f32 %v981, %v980
    %v983 = vmul.f32 0.5, %v982
    %v984 = vsub.f32 1.5, %v983
    %v985 = vmul.f32 %v980, %v984
    %v986 = vmul.f32 %v967, %v985
    %vm987 = vcmp.eq.f32.partialorder %v967, inf
    %v988 = vsel %vm987, %v967, %v986
    %vm989 = vcmp.eq.f32.partialorder %v967, 0.0
    %v990 = vand.u32 %v967, 2147483648
    %v991 = vsel %vm989, %v990, %v988
    %v992 = vperm.slane %v56, 2
    %v993 = vmul.f32 %v992, %v956
    %v994 = vmul.f32 %v992, %v957
    %v995 = vadd.f32 %v979, 1e-06
    %v996 = vadd.f32 %v991, 1e-06
    %v997 = vrcp.pop %v995
    %v998 = vmul.f32 %v995, %v997
    %v999 = vsub.f32 1.0, %v998
    %v1000 = vmul.f32 %v997, %v999
    %v1001 = vadd.f32 %v997, %v1000
    %vm1002 = vweird.f32 %v995
    %vm1003 = vweird.f32 %v997
    %vm1004 = vmor %vm1002, %vm1003
    %v1005 = vsel %vm1004, %v997, %v1001
    %v1006 = vand.u32 2147483647, %v995
    %vm1007 = vcmp.eq.f32.partialorder %v1006, 8.507059e+37
    %v1008 = vand.u32 %v995, 2147483648
    %v1009 = vor.u32 1.1754944e-38, %v1008
    %v1010 = vsel %vm1007, %v1009, %v1005
    %v1011 = vmul.f32 %v993, %v1010
    %v1012 = vrcp.pop %v996
    %v1013 = vmul.f32 %v996, %v1012
    %v1014 = vsub.f32 1.0, %v1013
    %v1015 = vmul.f32 %v1012, %v1014
    %v1016 = vadd.f32 %v1012, %v1015
    %vm1017 = vweird.f32 %v996
    %vm1018 = vweird.f32 %v1012
    %vm1019 = vmor %vm1017, %vm1018
    %v1020 = vsel %vm1019, %v1012, %v1016
    %v1021 = vand.u32 2147483647, %v996
    %vm1022 = vcmp.eq.f32.partialorder %v1021, 8.507059e+37
    %v1023 = vand.u32 %v996, 2147483648
    %v1024 = vor.u32 1.1754944e-38, %v1023
    %v1025 = vsel %vm1022, %v1024, %v1020
    %v1026 = vmul.f32 %v994, %v1025
    %v1027 = vperm.slane %v56, 3
    %v1028 = vadd.f32 %v1011, %v1027
    %v1029 = vadd.f32 %v1026, %v1027
    %v1030 = vld [vmem:[%s4] sm:$0xff]
    %v1031 = vld [vmem:[%s4 + $0x8] sm:$0xff]
    %v1032 = vld [vmem:[%s4 + $0x10] sm:$0xff]
    %v1033 = vld [vmem:[%s4 + $0x18] sm:$0xff]
    %v1034 = vperm.slane %v56, 6
    %v1036 = vsel %vm57, %v1028, 0
    %v1039 = vsel %vm57, %v1029, 0
    %1041 = vmatpush.msra.mxu0 0.0
    %1042 = vmatpush.msra.mxu0 0.0
    %1043 = vmatpush.msra.mxu0 0.0
    %1044 = vmatpush.msra.mxu0 0.0
    %1045 = vmatpush.msra.mxu0 0.0
    %1046 = vmatpush.msra.mxu0 0.0
    %1047 = vmatpush.msra.mxu0 0.0
    %1048 = vmatpush.msra.mxu0 0.0
    %1049 = vmatpush.msra.mxu0 0.0
    %1050 = vmatpush.msra.mxu0 0.0
    %1051 = vmatpush.msra.mxu0 0.0
    %1052 = vmatpush.msra.mxu0 0.0
    %1053 = vmatpush.msra.mxu0 %v1033
    %1054 = vmatpush.msra.mxu0 %v1032
    %1055 = vmatpush.msra.mxu0 %v1031
    %1056 = vmatpush.msra.mxu0 %v1030
    %1057 = vmatmul.f32.gmra.mxu0 %v1036
    %v1058 = vpop.f32.mrf.mxu0
    %v1059 = vadd.f32 %v1034, %v1058
    %1060 = vmatmul.f32.gmra.mxu0 %v1039
    %v1061 = vpop.f32.mrf.mxu0
    %v1062 = vadd.f32 %v1034, %v1061
    %1063 = vdwg.mxu0
    %v1064 = vmax.f32 %v1059, 0.0
    %v1065 = vmax.f32 %v1062, 0.0
    %v1066 = vld [vmem:[%s5] sm:$0xff]
    %v1067 = vld [vmem:[%s5 + $0x8] sm:$0xff]
    %v1068 = vld [vmem:[%s5 + $0x10] sm:$0xff]
    %v1069 = vld [vmem:[%s5 + $0x18] sm:$0xff]
    %v1070 = vld [vmem:[%s5 + $0x20] sm:$0xff]
    %v1071 = vld [vmem:[%s5 + $0x28] sm:$0xff]
    %v1072 = vld [vmem:[%s5 + $0x30] sm:$0xff]
    %v1073 = vld [vmem:[%s5 + $0x38] sm:$0xff]
    %v1074 = vperm.slane %v56, 7
    %vm1075 = vcmask 523264
    %v1077 = vsel %vm1075, %v1064, 0
    %v1080 = vsel %vm1075, %v1065, 0
    %1082 = vmatpush.msra.mxu0 0.0
    %1083 = vmatpush.msra.mxu0 0.0
    %1084 = vmatpush.msra.mxu0 0.0
    %1085 = vmatpush.msra.mxu0 0.0
    %1086 = vmatpush.msra.mxu0 0.0
    %1087 = vmatpush.msra.mxu0 0.0
    %1088 = vmatpush.msra.mxu0 0.0
    %1089 = vmatpush.msra.mxu0 0.0
    %1090 = vmatpush.msra.mxu0 %v1073
    %1091 = vmatpush.msra.mxu0 %v1072
    %1092 = vmatpush.msra.mxu0 %v1071
    %1093 = vmatpush.msra.mxu0 %v1070
    %1094 = vmatpush.msra.mxu0 %v1069
    %1095 = vmatpush.msra.mxu0 %v1068
    %1096 = vmatpush.msra.mxu0 %v1067
    %1097 = vmatpush.msra.mxu0 %v1066
    %1098 = vmatmul.f32.gmra.mxu0 %v1077
    %v1099 = vpop.f32.mrf.mxu0
    %v1100 = vadd.f32 %v1074, %v1099
    %1101 = vmatmul.f32.gmra.mxu0 %v1080
    %v1102 = vpop.f32.mrf.mxu0
    %v1103 = vadd.f32 %v1074, %v1102
    %1104 = vdwg.mxu0
    %v1105 = vadd.f32 %v946, %v1100
    %v1106 = vadd.f32 %v947, %v1103
    %1107 = vst.msk [vmem:[#allocation7] sm:$0xff] %vm57, %v1105
    %1108 = vst.msk [vmem:[#allocation7 + $0x8] sm:$0xff] %vm57, %v1106
    // Predicated region
    $region34: #{tpu_custom_call.1} parent=1 // pred_check
      _
    $region35: #{tpu_custom_call.1} parent=1 // pred_check_branch
      %1110 = sbr.rel (0) target = $region37
    $region36: #{tpu_custom_call.1} parent=1 // pred_region
      %1112 = vsyncadd [#allocation4], 0
      %s1113 = sshll.u32 [#allocation7], 4
      %s1114 = int_to_ptr.vmem [resolvable:$true] %s1113
      %s1115 = sshll.u32 %s6, 4
      %s1116 = int_to_ptr.hbm [resolvable:$true] %s1115
      %1121 = dma.vmem_to_hbm [thread:$0]  %s1114, 256, %s1116, [#allocation4], 128, 128, 8
    $region37: #{tpu_custom_call.1} parent=1 // pred_fallthru
      _
    // Predicated region
    $region38: #{tpu_custom_call.1} parent=1 // pred_check
      _
    $region39: #{tpu_custom_call.1} parent=1 // pred_check_branch
      %1123 = sbr.rel (0) target = $region41
    $region40: #{tpu_custom_call.1} parent=1 // pred_region
      %1125 = dma.done [#allocation4], 256
    $region41: #{tpu_custom_call.1} parent=1 // pred_fallthru
      _
    %1126 = vsyncpa [#allocation3], 1
    %1127 = vsyncpa [#allocation6], 1
    %1128 = vsyncpa [#allocation4], 1

</llo_original>
